<compile_context>
chip_gen: v7x
topology: tpu7x:2x2x1
jax: 0.10.0
libtpu: 0.0.40
codegen_flags: <defaults>
</compile_context>

<pallas_src>
import functools

import jax
import jax.numpy as jnp
from jax.experimental import pallas as pl
from jax.experimental.pallas import tpu as pltpu

LANE = 128


def _round_up(x, m):
    return ((x + m - 1) // m) * m


def gconv_kernel(a_ref, h_ref, w_ref, b_ref, o_ref, acc_ref, *, apply_relu):
    """One grid step of  O = A_hat @ (H @ W) + b  (optionally ReLU).

    Grid = (row tiles of A : "parallel", contraction tiles over A cols : "arbitrary").
      a_ref : [tm, tk]       bf16  tile of A_hat
      h_ref : [tk, f_in]     bf16  rows of H for this contraction block
      w_ref : [f_in, f_out]  bf16  resident weight
      b_ref : [1, f_out]     f32   resident bias
      o_ref : [tm, f_out]          output row tile (same block across k)
      acc   : [tm, f_out]    f32   VMEM accumulator scratch
    """
    k = pl.program_id(1)

    @pl.when(k == 0)
    def _():
        acc_ref[...] = jnp.zeros_like(acc_ref)

    # Project this contraction block's rows of H (cheap: f_in <= 128 << tm at scale).
    hw = jnp.dot(h_ref[...], w_ref[...], preferred_element_type=jnp.float32)
    # Aggregate with the A tile: bf16 MXU inputs, f32 accumulation.
    acc_ref[...] += jnp.dot(a_ref[...], hw.astype(jnp.bfloat16),
                            preferred_element_type=jnp.float32)

    @pl.when(k == pl.num_programs(1) - 1)
    def _():
        out = acc_ref[...] + b_ref[...]
        if apply_relu:
            out = jnp.maximum(out, 0.0)
        o_ref[...] = out.astype(o_ref.dtype)


def _padded_n_and_tiles(n):
    """Pick (n_pad, tm, tk), sized against v7x's 32 MiB scoped-VMEM default."""
    if n <= 512:
        n_pad = _round_up(n, 8)      # sublane multiple; full-array blocks below
        return n_pad, n_pad, n_pad
    tm, tk = 512, 512                # A tile (512,512) bf16 = 512 KiB x 2 buffers
    return _round_up(n, 512), tm, tk


def _gconv_layer(a_p, h_p, w_p, b_p, *, n_pad, tm, tk, f_in, f_out,
                 apply_relu, out_dtype):
    grid = (n_pad // tm, n_pad // tk)
    return pl.pallas_call(
        functools.partial(gconv_kernel, apply_relu=apply_relu),
        out_shape=jax.ShapeDtypeStruct((n_pad, f_out), out_dtype),
        grid=grid,
        in_specs=[
            pl.BlockSpec((tm, tk), lambda i, k: (i, k)),       # A_hat tile
            pl.BlockSpec((tk, f_in), lambda i, k: (k, 0)),     # H rows for block k
            pl.BlockSpec((f_in, f_out), lambda i, k: (0, 0)),  # W (resident)
            pl.BlockSpec((1, f_out), lambda i, k: (0, 0)),     # bias (resident)
        ],
        out_specs=pl.BlockSpec((tm, f_out), lambda i, k: (i, 0)),
        scratch_shapes=[pltpu.VMEM((tm, f_out), jnp.float32)],
        compiler_params=pltpu.CompilerParams(
            dimension_semantics=("parallel", "arbitrary"),
            vmem_limit_bytes=32 * 1024 * 1024),
    )(a_p, h_p, w_p, b_p)


@jax.jit
def graphsage_forward(a_hat, x, params):
    w1, b1, w2, b2, w3, b3 = params
    n = x.shape[0]
    in_dim, hidden_dim = w1.shape
    out_dim = w3.shape[1]

    n_pad, tm, tk = _padded_n_and_tiles(n)
    fi = _round_up(in_dim, LANE)
    fh = _round_up(hidden_dim, LANE)
    fo = _round_up(out_dim, LANE)

    # Zero-pad to lane/sublane-friendly shapes; bf16 operands for the MXU.
    # (Zero columns/rows stay exactly zero through matmul/bias/ReLU, so padding
    # never leaks into the valid [:n, :out_dim] region.)
    a_p = jnp.pad(a_hat, ((0, n_pad - n), (0, n_pad - n))).astype(jnp.bfloat16)
    x_p = jnp.pad(x, ((0, n_pad - n), (0, fi - in_dim))).astype(jnp.bfloat16)
    w1p = jnp.pad(w1, ((0, fi - in_dim), (0, fh - hidden_dim))).astype(jnp.bfloat16)
    w2p = jnp.pad(w2, ((0, fh - hidden_dim), (0, fh - hidden_dim))).astype(jnp.bfloat16)
    w3p = jnp.pad(w3, ((0, fh - hidden_dim), (0, fo - out_dim))).astype(jnp.bfloat16)
    b1p = jnp.pad(b1, ((0, 0), (0, fh - hidden_dim))).astype(jnp.float32)
    b2p = jnp.pad(b2, ((0, 0), (0, fh - hidden_dim))).astype(jnp.float32)
    b3p = jnp.pad(b3, ((0, 0), (0, fo - out_dim))).astype(jnp.float32)

    layer = functools.partial(_gconv_layer, a_p, n_pad=n_pad, tm=tm, tk=tk)

    h = layer(x_p, w1p, b1p, f_in=fi, f_out=fh,
              apply_relu=True, out_dtype=jnp.bfloat16)     # conv1 + relu
    h = layer(h, w2p, b2p, f_in=fh, f_out=fh,
              apply_relu=True, out_dtype=jnp.bfloat16)     # conv2 + relu
    h = layer(h, w2p, b2p, f_in=fh, f_out=fh,
              apply_relu=True, out_dtype=jnp.bfloat16)     # conv2 (shared) + relu
    out = layer(h, w3p, b3p, f_in=fh, f_out=fo,
                apply_relu=False, out_dtype=jnp.float32)   # conv3 (no relu)
    return out[:n, :out_dim]


def build_normalized_adjacency(key, num_nodes):
    """Random undirected graph + self-loops, symmetric (norm='both') normalization."""
    a = jax.random.bernoulli(key, p=0.3, shape=(num_nodes, num_nodes))
    a = a.astype(jnp.float32)
    a = jnp.maximum(a, a.T)                       # symmetrize (undirected)
    a = a * (1.0 - jnp.eye(num_nodes))            # drop random diagonal
    a = a + jnp.eye(num_nodes)                    # dgl.add_self_loop
    deg = a.sum(axis=1)
    d_inv_sqrt = 1.0 / jnp.sqrt(deg)
    return (d_inv_sqrt[:, None] * a) * d_inv_sqrt[None, :]


def init_params(key, in_dim, hidden_dim, out_dim):
    k1, k2, k3 = jax.random.split(key, 3)

    def xavier(k, fan_in, fan_out):
        limit = jnp.sqrt(6.0 / (fan_in + fan_out))
        return jax.random.uniform(k, (fan_in, fan_out), jnp.float32, -limit, limit)

    w1 = xavier(k1, in_dim, hidden_dim)
    w2 = xavier(k2, hidden_dim, hidden_dim)
    w3 = xavier(k3, hidden_dim, out_dim)
    b1 = jnp.zeros((1, hidden_dim), jnp.float32)
    b2 = jnp.zeros((1, hidden_dim), jnp.float32)
    b3 = jnp.zeros((1, out_dim), jnp.float32)
    return (w1, b1, w2, b2, w3, b3)


def reference_forward(a_hat, x, params):
    """Pure-JAX f32 reference of the same math (for a sanity check)."""
    w1, b1, w2, b2, w3, b3 = params
    gc = lambda h, w, b: a_hat @ (h @ w) + b
    h = jax.nn.relu(gc(x, w1, b1))
    h = jax.nn.relu(gc(h, w2, b2))
    h = jax.nn.relu(gc(h, w2, b2))
    return gc(h, w3, b3)


if __name__ == "__main__":
    in_dim, hidden_dim, out_dim = 8, 4, 4
    num_nodes = 16

    key = jax.random.PRNGKey(0)
    k_graph, k_feat, k_param = jax.random.split(key, 3)

    a_hat = build_normalized_adjacency(k_graph, num_nodes)              # [N, N]
    features = jax.random.normal(k_feat, (num_nodes, in_dim), jnp.float32)
    params = init_params(k_param, in_dim, hidden_dim, out_dim)

    out = graphsage_forward(a_hat, features, params)
    out = jax.block_until_ready(out)

    ref = reference_forward(a_hat, features, params)
    assert out.shape == (num_nodes, out_dim)
    # Looser tolerance than the f32 version: bf16 MXU operands (f32 accumulate).
    assert jnp.allclose(out, ref, atol=5e-2, rtol=5e-2)

    print("KERNEL_OK")
</pallas_src>

<mosaic_0001>
module attributes {stable_mosaic.version = 11 : i64} {
  func.func @gconv_kernel(%arg0: i32, %arg1: i32, %arg2: memref<16x16xbf16, #tpu.memory_space<vmem>>, %arg3: memref<16x128xbf16, #tpu.memory_space<vmem>>, %arg4: memref<128x128xbf16, #tpu.memory_space<vmem>>, %arg5: memref<1x128xf32, #tpu.memory_space<vmem>>, %arg6: memref<16x128xf32, #tpu.memory_space<vmem>>, %arg7: memref<16x128xf32, #tpu.memory_space<vmem>>) attributes {dimension_semantics = [#tpu.dimension_semantics<parallel>, #tpu.dimension_semantics<arbitrary>], iteration_bounds = array<i64: 1, 1>, scalar_prefetch = 0 : i64, scratch_operands = 1 : i64, tpu.core_type = #tpu.core_type<tc>, window_params = [{transform_indices = @transform_0, window_bounds = array<i64: 16, 16>}, {transform_indices = @transform_1, window_bounds = array<i64: 16, 128>}, {pipeline_mode = #tpu.pipeline_mode<synchronous>, transform_indices = @transform_2, window_bounds = array<i64: 128, 128>}, {pipeline_mode = #tpu.pipeline_mode<synchronous>, transform_indices = @transform_3, window_bounds = array<i64: 1, 128>}, {transform_indices = @transform_4, window_bounds = array<i64: 16, 128>}]} {
    %c0_i32 = arith.constant 0 : i32
    %0 = arith.cmpi eq, %arg1, %c0_i32 : i32
    %1 = arith.extui %0 : i1 to i32
    %c0_i32_0 = arith.constant 0 : i32
    %2 = arith.cmpi ne, %1, %c0_i32_0 : i32
    scf.if %2 {
      %cst_13 = arith.constant 0.000000e+00 : f32
      %15 = vector.broadcast %cst_13 : f32 to vector<16x128xf32>
      %c0_14 = arith.constant 0 : index
      %c0_15 = arith.constant 0 : index
      %16 = vector.load %arg7[%c0_14, %c0_15] : memref<16x128xf32, #tpu.memory_space<vmem>>, vector<16x128xf32>
      tpu.vector_store %arg7[%c0_14, %c0_15], %15 {strides = array<i32>} : memref<16x128xf32, #tpu.memory_space<vmem>>, vector<16x128xf32>,
    } else {
    }
    %c0 = arith.constant 0 : index
    %c0_1 = arith.constant 0 : index
    %3 = vector.load %arg3[%c0, %c0_1] : memref<16x128xbf16, #tpu.memory_space<vmem>>, vector<16x128xbf16>
    %c0_2 = arith.constant 0 : index
    %c0_3 = arith.constant 0 : index
    %4 = vector.load %arg4[%c0_2, %c0_3] : memref<128x128xbf16, #tpu.memory_space<vmem>>, vector<128x128xbf16>
    %cst = arith.constant dense<0.000000e+00> : vector<16x128xf32>
    %5 = tpu.matmul %3, %4, %cst {dimension_numbers = #tpu.dot_dimension_numbers<[1], [0], [0], [1], [0, 0, 1, 1], [], []>} : vector<16x128xbf16>, vector<128x128xbf16>, vector<16x128xf32> -> vector<16x128xf32>
    %c0_4 = arith.constant 0 : index
    %c0_5 = arith.constant 0 : index
    %6 = vector.load %arg7[%c0_4, %c0_5] : memref<16x128xf32, #tpu.memory_space<vmem>>, vector<16x128xf32>
    %c0_6 = arith.constant 0 : index
    %c0_7 = arith.constant 0 : index
    %7 = vector.load %arg2[%c0_6, %c0_7] : memref<16x16xbf16, #tpu.memory_space<vmem>>, vector<16x16xbf16>
    %8 = arith.truncf %5 : vector<16x128xf32> to vector<16x128xbf16>
    %cst_8 = arith.constant dense<0.000000e+00> : vector<16x128xf32>
    %9 = tpu.matmul %7, %8, %cst_8 {dimension_numbers = #tpu.dot_dimension_numbers<[1], [0], [0], [1], [0, 0, 1, 1], [], []>} : vector<16x16xbf16>, vector<16x128xbf16>, vector<16x128xf32> -> vector<16x128xf32>
    %10 = arith.addf %6, %9 : vector<16x128xf32>
    %c0_9 = arith.constant 0 : index
    %c0_10 = arith.constant 0 : index
    %11 = vector.load %arg7[%c0_9, %c0_10] : memref<16x128xf32, #tpu.memory_space<vmem>>, vector<16x128xf32>
    tpu.vector_store %arg7[%c0_9, %c0_10], %10 {strides = array<i32>} : memref<16x128xf32, #tpu.memory_space<vmem>>, vector<16x128xf32>,
    %c0_i32_11 = arith.constant 0 : i32
    %12 = arith.cmpi eq, %arg1, %c0_i32_11 : i32
    %13 = arith.extui %12 : i1 to i32
    %c0_i32_12 = arith.constant 0 : i32
    %14 = arith.cmpi ne, %13, %c0_i32_12 : i32
    scf.if %14 {
      %c0_13 = arith.constant 0 : index
      %c0_14 = arith.constant 0 : index
      %15 = vector.load %arg7[%c0_13, %c0_14] : memref<16x128xf32, #tpu.memory_space<vmem>>, vector<16x128xf32>
      %c0_15 = arith.constant 0 : index
      %c0_16 = arith.constant 0 : index
      %16 = vector.load %arg5[%c0_15, %c0_16] : memref<1x128xf32, #tpu.memory_space<vmem>>, vector<1x128xf32>
      %17 = vector.broadcast %16 : vector<1x128xf32> to vector<16x128xf32>
      %18 = arith.addf %15, %17 : vector<16x128xf32>
      %c0_17 = arith.constant 0 : index
      %c0_18 = arith.constant 0 : index
      %19 = vector.load %arg6[%c0_17, %c0_18] : memref<16x128xf32, #tpu.memory_space<vmem>>, vector<16x128xf32>
      tpu.vector_store %arg6[%c0_17, %c0_18], %18 {strides = array<i32>} : memref<16x128xf32, #tpu.memory_space<vmem>>, vector<16x128xf32>,
    } else {
    }
    return
  }
  func.func @transform_0(%arg0: i32, %arg1: i32) -> (i32, i32) {
    %c0_i32 = arith.constant 0 : i32
    return %arg0, %arg1 : i32, i32
  }
  func.func @transform_1(%arg0: i32, %arg1: i32) -> (i32, i32) {
    %c0_i32 = arith.constant 0 : i32
    %c0_i32_0 = arith.constant 0 : i32
    return %arg1, %c0_i32 : i32, i32
  }
  func.func @transform_2(%arg0: i32, %arg1: i32) -> (i32, i32) {
    %c0_i32 = arith.constant 0 : i32
    %c0_i32_0 = arith.constant 0 : i32
    %c0_i32_1 = arith.constant 0 : i32
    return %c0_i32, %c0_i32_0 : i32, i32
  }
  func.func @transform_3(%arg0: i32, %arg1: i32) -> (i32, i32) {
    %c0_i32 = arith.constant 0 : i32
    %c0_i32_0 = arith.constant 0 : i32
    %c0_i32_1 = arith.constant 0 : i32
    return %c0_i32, %c0_i32_0 : i32, i32
  }
  func.func @transform_4(%arg0: i32, %arg1: i32) -> (i32, i32) {
    %c0_i32 = arith.constant 0 : i32
    %c0_i32_0 = arith.constant 0 : i32
    return %arg0, %c0_i32 : i32, i32
  }
}

module attributes {stable_mosaic.version = 11 : i64} {
  func.func @gconv_kernel(%arg0: i32, %arg1: i32, %arg2: memref<16x16xbf16, #tpu.memory_space<vmem>>, %arg3: memref<16x128xbf16, #tpu.memory_space<vmem>>, %arg4: memref<128x128xbf16, #tpu.memory_space<vmem>>, %arg5: memref<1x128xf32, #tpu.memory_space<vmem>>, %arg6: memref<16x128xbf16, #tpu.memory_space<vmem>>, %arg7: memref<16x128xf32, #tpu.memory_space<vmem>>) attributes {dimension_semantics = [#tpu.dimension_semantics<parallel>, #tpu.dimension_semantics<arbitrary>], iteration_bounds = array<i64: 1, 1>, scalar_prefetch = 0 : i64, scratch_operands = 1 : i64, tpu.core_type = #tpu.core_type<tc>, window_params = [{transform_indices = @transform_0, window_bounds = array<i64: 16, 16>}, {transform_indices = @transform_1, window_bounds = array<i64: 16, 128>}, {pipeline_mode = #tpu.pipeline_mode<synchronous>, transform_indices = @transform_2, window_bounds = array<i64: 128, 128>}, {pipeline_mode = #tpu.pipeline_mode<synchronous>, transform_indices = @transform_3, window_bounds = array<i64: 1, 128>}, {transform_indices = @transform_4, window_bounds = array<i64: 16, 128>}]} {
    %c0_i32 = arith.constant 0 : i32
    %0 = arith.cmpi eq, %arg1, %c0_i32 : i32
    %1 = arith.extui %0 : i1 to i32
    %c0_i32_0 = arith.constant 0 : i32
    %2 = arith.cmpi ne, %1, %c0_i32_0 : i32
    scf.if %2 {
      %cst_13 = arith.constant 0.000000e+00 : f32
      %15 = vector.broadcast %cst_13 : f32 to vector<16x128xf32>
      %c0_14 = arith.constant 0 : index
      %c0_15 = arith.constant 0 : index
      %16 = vector.load %arg7[%c0_14, %c0_15] : memref<16x128xf32, #tpu.memory_space<vmem>>, vector<16x128xf32>
      tpu.vector_store %arg7[%c0_14, %c0_15], %15 {strides = array<i32>} : memref<16x128xf32, #tpu.memory_space<vmem>>, vector<16x128xf32>,
    } else {
    }
    %c0 = arith.constant 0 : index
    %c0_1 = arith.constant 0 : index
    %3 = vector.load %arg3[%c0, %c0_1] : memref<16x128xbf16, #tpu.memory_space<vmem>>, vector<16x128xbf16>
    %c0_2 = arith.constant 0 : index
    %c0_3 = arith.constant 0 : index
    %4 = vector.load %arg4[%c0_2, %c0_3] : memref<128x128xbf16, #tpu.memory_space<vmem>>, vector<128x128xbf16>
    %cst = arith.constant dense<0.000000e+00> : vector<16x128xf32>
    %5 = tpu.matmul %3, %4, %cst {dimension_numbers = #tpu.dot_dimension_numbers<[1], [0], [0], [1], [0, 0, 1, 1], [], []>} : vector<16x128xbf16>, vector<128x128xbf16>, vector<16x128xf32> -> vector<16x128xf32>
    %c0_4 = arith.constant 0 : index
    %c0_5 = arith.constant 0 : index
    %6 = vector.load %arg7[%c0_4, %c0_5] : memref<16x128xf32, #tpu.memory_space<vmem>>, vector<16x128xf32>
    %c0_6 = arith.constant 0 : index
    %c0_7 = arith.constant 0 : index
    %7 = vector.load %arg2[%c0_6, %c0_7] : memref<16x16xbf16, #tpu.memory_space<vmem>>, vector<16x16xbf16>
    %8 = arith.truncf %5 : vector<16x128xf32> to vector<16x128xbf16>
    %cst_8 = arith.constant dense<0.000000e+00> : vector<16x128xf32>
    %9 = tpu.matmul %7, %8, %cst_8 {dimension_numbers = #tpu.dot_dimension_numbers<[1], [0], [0], [1], [0, 0, 1, 1], [], []>} : vector<16x16xbf16>, vector<16x128xbf16>, vector<16x128xf32> -> vector<16x128xf32>
    %10 = arith.addf %6, %9 : vector<16x128xf32>
    %c0_9 = arith.constant 0 : index
    %c0_10 = arith.constant 0 : index
    %11 = vector.load %arg7[%c0_9, %c0_10] : memref<16x128xf32, #tpu.memory_space<vmem>>, vector<16x128xf32>
    tpu.vector_store %arg7[%c0_9, %c0_10], %10 {strides = array<i32>} : memref<16x128xf32, #tpu.memory_space<vmem>>, vector<16x128xf32>,
    %c0_i32_11 = arith.constant 0 : i32
    %12 = arith.cmpi eq, %arg1, %c0_i32_11 : i32
    %13 = arith.extui %12 : i1 to i32
    %c0_i32_12 = arith.constant 0 : i32
    %14 = arith.cmpi ne, %13, %c0_i32_12 : i32
    scf.if %14 {
      %c0_13 = arith.constant 0 : index
      %c0_14 = arith.constant 0 : index
      %15 = vector.load %arg7[%c0_13, %c0_14] : memref<16x128xf32, #tpu.memory_space<vmem>>, vector<16x128xf32>
      %c0_15 = arith.constant 0 : index
      %c0_16 = arith.constant 0 : index
      %16 = vector.load %arg5[%c0_15, %c0_16] : memref<1x128xf32, #tpu.memory_space<vmem>>, vector<1x128xf32>
      %17 = vector.broadcast %16 : vector<1x128xf32> to vector<16x128xf32>
      %18 = arith.addf %15, %17 : vector<16x128xf32>
      %cst_17 = arith.constant 0.000000e+00 : f32
      %19 = vector.broadcast %cst_17 : f32 to vector<16x128xf32>
      %20 = arith.maximumf %18, %19 : vector<16x128xf32>
      %21 = arith.truncf %20 : vector<16x128xf32> to vector<16x128xbf16>
      %c0_18 = arith.constant 0 : index
      %c0_19 = arith.constant 0 : index
      %22 = vector.load %arg6[%c0_18, %c0_19] : memref<16x128xbf16, #tpu.memory_space<vmem>>, vector<16x128xbf16>
      tpu.vector_store %arg6[%c0_18, %c0_19], %21 {strides = array<i32>} : memref<16x128xbf16, #tpu.memory_space<vmem>>, vector<16x128xbf16>,
    } else {
    }
    return
  }
  func.func @transform_0(%arg0: i32, %arg1: i32) -> (i32, i32) {
    %c0_i32 = arith.constant 0 : i32
    return %arg0, %arg1 : i32, i32
  }
  func.func @transform_1(%arg0: i32, %arg1: i32) -> (i32, i32) {
    %c0_i32 = arith.constant 0 : i32
    %c0_i32_0 = arith.constant 0 : i32
    return %arg1, %c0_i32 : i32, i32
  }
  func.func @transform_2(%arg0: i32, %arg1: i32) -> (i32, i32) {
    %c0_i32 = arith.constant 0 : i32
    %c0_i32_0 = arith.constant 0 : i32
    %c0_i32_1 = arith.constant 0 : i32
    return %c0_i32, %c0_i32_0 : i32, i32
  }
  func.func @transform_3(%arg0: i32, %arg1: i32) -> (i32, i32) {
    %c0_i32 = arith.constant 0 : i32
    %c0_i32_0 = arith.constant 0 : i32
    %c0_i32_1 = arith.constant 0 : i32
    return %c0_i32, %c0_i32_0 : i32, i32
  }
  func.func @transform_4(%arg0: i32, %arg1: i32) -> (i32, i32) {
    %c0_i32 = arith.constant 0 : i32
    %c0_i32_0 = arith.constant 0 : i32
    return %arg0, %c0_i32 : i32, i32
  }
}

</mosaic_0001>

<llo_original>
// kernel: graphsage_forward.7
$region0: #{graphsage_forward.7}
  #allocation0 [shape = 'u32[]', space=smem, size = 0x4, offset = 0x4, fixed_abs, tag = 'smem constant byte address 0x4 - core index']
  #allocation1 [shape = 'u32[144,128]{1,0:T(1,128)}', space=vmem, size = 0x12000, scoped, tag = 'internal scratch']
  #allocation2 [shape = 'f32[16,128]{1,0:T(8,128)}', space=vmem, size = 0x2000, scoped, tag = 'scratch operand']
  %s0 = inlined_call_operand.vmem [shape: bf16[16,16], index: 0, kind: input, shape index: {}]
  %s1 = inlined_call_operand.vmem [shape: bf16[16,128], index: 1, kind: input, shape index: {}]
  %s2 = inlined_call_operand.vmem [shape: bf16[128,128], index: 2, kind: input, shape index: {}]
  %s3 = inlined_call_operand.vmem [shape: f32[1,128], index: 3, kind: input, shape index: {}]
  %s4 = inlined_call_operand.vmem [shape: f32[16,128], index: 4, kind: output, shape index: {}]
  %s5 = sld [smem:[#allocation0]]
  $region34: #{graphsage_forward.7} parent=0
    _
  %s7 = ssub.s32 1, %s5
  %s8 = scalar_select 0, %s7, %s5
  // Predicated region
  $region2: #{graphsage_forward.7} parent=0 // pred_check
    _
  $region3: #{graphsage_forward.7} parent=0 // pred_check_branch
    %10 = sbr.rel (0) target = $region5
  $region4: #{graphsage_forward.7} parent=0 // pred_region
    _
  $region5: #{graphsage_forward.7} parent=0 // pred_fallthru
    _
  // Predicated region
  $region6: #{graphsage_forward.7} parent=0 // pred_check
    _
  $region7: #{graphsage_forward.7} parent=0 // pred_check_branch
    %12 = sbr.rel (0) target = $region9
  $region8: #{graphsage_forward.7} parent=0 // pred_region
    _
  $region9: #{graphsage_forward.7} parent=0 // pred_fallthru
    _
  // Predicated region
  $region10: #{graphsage_forward.7} parent=0 // pred_check
    _
  $region11: #{graphsage_forward.7} parent=0 // pred_check_branch
    %14 = sbr.rel (0) target = $region13
  $region12: #{graphsage_forward.7} parent=0 // pred_region
    _
  $region13: #{graphsage_forward.7} parent=0 // pred_fallthru
    _
  // Predicated region
  $region14: #{graphsage_forward.7} parent=0 // pred_check
    _
  $region15: #{graphsage_forward.7} parent=0 // pred_check_branch
    %16 = sbr.rel (0) target = $region17
  $region16: #{graphsage_forward.7} parent=0 // pred_region
    _
  $region17: #{graphsage_forward.7} parent=0 // pred_fallthru
    _
  %p18 = scmp.eq.s32.totalorder 0, 0
  // Predicated region
  $region18: #{graphsage_forward.7} parent=0 // pred_check
    %p19 = pneg %p18
  $region19: #{graphsage_forward.7} parent=0 // pred_check_branch
    %21 = sbr.rel (%p19) target = $region21
  $region20: #{graphsage_forward.7} parent=0 // pred_region
    %22 = vst [vmem:[#allocation2] sm:$0xff] 0.0
    %23 = vst [vmem:[#allocation2 + $0x8] sm:$0xff] 0.0
  $region21: #{graphsage_forward.7} parent=0 // pred_fallthru
    _
  %v24 = vld [vmem:[%s1] sm:$0xf]
  %v25 = vld [vmem:[%s1 + $0x4] sm:$0xf]
  %v26 = vld [vmem:[%s2] sm:$0xf]
  %v27 = vld [vmem:[%s2 + $0x4] sm:$0xf]
  %v28 = vld [vmem:[%s2 + $0x8] sm:$0xf]
  %v29 = vld [vmem:[%s2 + $0xc] sm:$0xf]
  %v30 = vld [vmem:[%s2 + $0x10] sm:$0xf]
  %v31 = vld [vmem:[%s2 + $0x14] sm:$0xf]
  %v32 = vld [vmem:[%s2 + $0x18] sm:$0xf]
  %v33 = vld [vmem:[%s2 + $0x1c] sm:$0xf]
  %v34 = vld [vmem:[%s2 + $0x20] sm:$0xf]
  %v35 = vld [vmem:[%s2 + $0x24] sm:$0xf]
  %v36 = vld [vmem:[%s2 + $0x28] sm:$0xf]
  %v37 = vld [vmem:[%s2 + $0x2c] sm:$0xf]
  %v38 = vld [vmem:[%s2 + $0x30] sm:$0xf]
  %v39 = vld [vmem:[%s2 + $0x34] sm:$0xf]
  %v40 = vld [vmem:[%s2 + $0x38] sm:$0xf]
  %v41 = vld [vmem:[%s2 + $0x3c] sm:$0xf]
  %v44 = vunpack.c.l.b16 %v24
  %v45 = vunpack.c.l.b16 %v25
  %v46 = vpack.c.b16 %v45, %v44
  %v64 = vunpack.c.l.b16 %v26
  %v65 = vunpack.c.l.b16 %v27
  %v66 = vunpack.c.l.b16 %v28
  %v67 = vunpack.c.l.b16 %v29
  %v68 = vunpack.c.l.b16 %v30
  %v69 = vunpack.c.l.b16 %v31
  %v70 = vunpack.c.l.b16 %v32
  %v71 = vunpack.c.l.b16 %v33
  %v72 = vunpack.c.l.b16 %v34
  %v73 = vunpack.c.l.b16 %v35
  %v74 = vunpack.c.l.b16 %v36
  %v75 = vunpack.c.l.b16 %v37
  %v76 = vunpack.c.l.b16 %v38
  %v77 = vunpack.c.l.b16 %v39
  %v78 = vunpack.c.l.b16 %v40
  %v79 = vunpack.c.l.b16 %v41
  %v80 = vpack.c.b16 %v65, %v64
  %v81 = vpack.c.b16 %v67, %v66
  %v82 = vpack.c.b16 %v69, %v68
  %v83 = vpack.c.b16 %v71, %v70
  %v84 = vpack.c.b16 %v73, %v72
  %v85 = vpack.c.b16 %v75, %v74
  %v86 = vpack.c.b16 %v77, %v76
  %v87 = vpack.c.b16 %v79, %v78
  %96 = vmatprep.subr.bf16.mxu0 0
  %97 = vmatpush1.bf16.msra.mxu0 %v80
  %98 = vmatprep.subr.bf16.mxu0 0
  %99 = vmatpush1.bf16.msra.mxu0 %v81
  %100 = vmatprep.subr.bf16.mxu0 0
  %101 = vmatpush1.bf16.msra.mxu0 %v82
  %102 = vmatprep.subr.bf16.mxu0 0
  %103 = vmatpush1.bf16.msra.mxu0 %v83
  %104 = vmatprep.subr.bf16.mxu0 0
  %105 = vmatpush1.bf16.msra.mxu0 %v84
  %106 = vmatprep.subr.bf16.mxu0 0
  %107 = vmatpush1.bf16.msra.mxu0 %v85
  %108 = vmatprep.subr.bf16.mxu0 0
  %109 = vmatpush1.bf16.msra.mxu0 %v86
  %110 = vmatprep.subr.bf16.mxu0 0
  %111 = vmatpush1.bf16.msra.mxu0 %v87
  %112 = vmatprep.subr.bf16.mxu0 0
  %113 = vmatpush1.bf16.msra.mxu0 0
  %114 = vmatprep.subr.bf16.mxu0 0
  %115 = vmatpush1.bf16.msra.mxu0 0
  %116 = vmatprep.subr.bf16.mxu0 0
  %117 = vmatpush1.bf16.msra.mxu0 0
  %118 = vmatprep.subr.bf16.mxu0 0
  %119 = vmatpush1.bf16.msra.mxu0 0
  %120 = vmatprep.subr.bf16.mxu0 0
  %121 = vmatpush1.bf16.msra.mxu0 0
  %122 = vmatprep.subr.bf16.mxu0 0
  %123 = vmatpush1.bf16.msra.mxu0 0
  %124 = vmatprep.subr.bf16.mxu0 0
  %125 = vmatpush1.bf16.msra.mxu0 0
  %126 = vmatprep.subr.bf16.mxu0 0
  %127 = vmatpush1.bf16.msra.mxu0 0
  %128 = vmatprep.mubr.bf16.mxu0 0
  %129 = vmatmul.mubr.bf16.gmra.mrb[0].mxu0 %v46
  %v130 = vpop.f32.mrb[0].mxu0
  %v131 = vadd.f32 0.0, %v130
  %v132 = vpop.f32.mrb[0].mxu0
  %v133 = vpop.f32.mrb[0].mxu0
  %v134 = vadd.f32 0.0, %v133
  %v135 = vpop.f32.mrb[0].mxu0
  %136 = vdwg.mxu0
  %v137 = vld [vmem:[#allocation2] sm:$0xff]
  %v138 = vld [vmem:[#allocation2 + $0x8] sm:$0xff]
  %v139 = vld [vmem:[%s0] sm:$0xf]
  %v140 = vld [vmem:[%s0 + $0x4] sm:$0xf]
  %v141 = vpack.c.bf16 %v134, %v131
  %v144 = vunpack.c.l.b16 %v139
  %v145 = vunpack.c.l.b16 %v140
  %v146 = vpack.c.b16 %v145, %v144
  %vm147 = vcmask 130048
  %v149 = vsel %vm147, %v146, 0
  %151 = vmatprep.subr.bf16.mxu0 0
  %152 = vmatpush1.bf16.msra.mxu0 %v141
  %153 = vmatprep.subr.bf16.mxu0 0
  %154 = vmatpush1.bf16.msra.mxu0 0
  %155 = vmatprep.subr.bf16.mxu0 0
  %156 = vmatpush1.bf16.msra.mxu0 0
  %157 = vmatprep.subr.bf16.mxu0 0
  %158 = vmatpush1.bf16.msra.mxu0 0
  %159 = vmatprep.subr.bf16.mxu0 0
  %160 = vmatpush1.bf16.msra.mxu0 0
  %161 = vmatprep.subr.bf16.mxu0 0
  %162 = vmatpush1.bf16.msra.mxu0 0
  %163 = vmatprep.subr.bf16.mxu0 0
  %164 = vmatpush1.bf16.msra.mxu0 0
  %165 = vmatprep.subr.bf16.mxu0 0
  %166 = vmatpush1.bf16.msra.mxu0 0
  %167 = vmatprep.subr.bf16.mxu0 0
  %168 = vmatpush1.bf16.msra.mxu0 0
  %169 = vmatprep.subr.bf16.mxu0 0
  %170 = vmatpush1.bf16.msra.mxu0 0
  %171 = vmatprep.subr.bf16.mxu0 0
  %172 = vmatpush1.bf16.msra.mxu0 0
  %173 = vmatprep.subr.bf16.mxu0 0
  %174 = vmatpush1.bf16.msra.mxu0 0
  %175 = vmatprep.subr.bf16.mxu0 0
  %176 = vmatpush1.bf16.msra.mxu0 0
  %177 = vmatprep.subr.bf16.mxu0 0
  %178 = vmatpush1.bf16.msra.mxu0 0
  %179 = vmatprep.subr.bf16.mxu0 0
  %180 = vmatpush1.bf16.msra.mxu0 0
  %181 = vmatprep.subr.bf16.mxu0 0
  %182 = vmatpush1.bf16.msra.mxu0 0
  %183 = vmatprep.mubr.bf16.mxu0 0
  %184 = vmatmul.mubr.bf16.gmra.mrb[0].mxu0 %v149
  %v185 = vpop.f32.mrb[0].mxu0
  %v186 = vadd.f32 0.0, %v185
  %v187 = vpop.f32.mrb[0].mxu0
  %v188 = vpop.f32.mrb[0].mxu0
  %v189 = vadd.f32 0.0, %v188
  %v190 = vpop.f32.mrb[0].mxu0
  %191 = vdwg.mxu0
  %v192 = vadd.f32 %v137, %v186
  %v193 = vadd.f32 %v138, %v189
  %194 = vst [vmem:[#allocation2] sm:$0xff] %v192
  %195 = vst [vmem:[#allocation2 + $0x8] sm:$0xff] %v193
  // Predicated region
  $region22: #{graphsage_forward.7} parent=0 // pred_check
    %p196 = pneg %p18
  $region23: #{graphsage_forward.7} parent=0 // pred_check_branch
    %198 = sbr.rel (%p196) target = $region25
  $region24: #{graphsage_forward.7} parent=0 // pred_region
    %v199 = vld [vmem:[#allocation2] sm:$0xff]
    %v200 = vld [vmem:[#allocation2 + $0x8] sm:$0xff]
    %v201 = vld [vmem:[%s3] sm:$0x1]
    %v203 = vlaneseq
    %v204 = vshrl.u32 %v203, 7
    %v205 = vsub.s32 0, %v204
    %v206 = vrot.slane %v201, %v205
    %v208 = vadd.f32 %v199, %v206
    %v209 = vadd.f32 %v200, %v206
    %210 = vst [vmem:[%s4] sm:$0xff] %v208
    %211 = vst [vmem:[%s4 + $0x8] sm:$0xff] %v209
  $region25: #{graphsage_forward.7} parent=0 // pred_fallthru
    _
  // Predicated region
  $region26: #{graphsage_forward.7} parent=0 // pred_check
    _
  $region27: #{graphsage_forward.7} parent=0 // pred_check_branch
    %213 = sbr.rel (0) target = $region29
  $region28: #{graphsage_forward.7} parent=0 // pred_region
    _
  $region29: #{graphsage_forward.7} parent=0 // pred_fallthru
    _
  // Predicated region
  $region30: #{graphsage_forward.7} parent=0 // pred_check
    _
  $region31: #{graphsage_forward.7} parent=0 // pred_check_branch
    %215 = sbr.rel (0) target = $region33
  $region32: #{graphsage_forward.7} parent=0 // pred_region
    _
  $region33: #{graphsage_forward.7} parent=0 // pred_fallthru
    _

// kernel: graphsage_forward.4
$region0: #{graphsage_forward.4}
  #allocation0 [shape = 'u32[]', space=smem, size = 0x4, offset = 0x4, fixed_abs, tag = 'smem constant byte address 0x4 - core index']
  #allocation1 [shape = 'u32[144,128]{1,0:T(1,128)}', space=vmem, size = 0x12000, scoped, tag = 'internal scratch']
  #allocation2 [shape = 'f32[16,128]{1,0:T(8,128)}', space=vmem, size = 0x2000, scoped, tag = 'scratch operand']
  %s0 = inlined_call_operand.vmem [shape: bf16[16,16], index: 0, kind: input, shape index: {}]
  %s1 = inlined_call_operand.vmem [shape: bf16[16,128], index: 1, kind: input, shape index: {}]
  %s2 = inlined_call_operand.vmem [shape: bf16[128,128], index: 2, kind: input, shape index: {}]
  %s3 = inlined_call_operand.vmem [shape: f32[1,128], index: 3, kind: input, shape index: {}]
  %s4 = inlined_call_operand.vmem [shape: bf16[16,128], index: 4, kind: output, shape index: {}]
  %s5 = sld [smem:[#allocation0]]
  $region34: #{graphsage_forward.4} parent=0
    _
  %s7 = ssub.s32 1, %s5
  %s8 = scalar_select 0, %s7, %s5
  // Predicated region
  $region2: #{graphsage_forward.4} parent=0 // pred_check
    _
  $region3: #{graphsage_forward.4} parent=0 // pred_check_branch
    %10 = sbr.rel (0) target = $region5
  $region4: #{graphsage_forward.4} parent=0 // pred_region
    _
  $region5: #{graphsage_forward.4} parent=0 // pred_fallthru
    _
  // Predicated region
  $region6: #{graphsage_forward.4} parent=0 // pred_check
    _
  $region7: #{graphsage_forward.4} parent=0 // pred_check_branch
    %12 = sbr.rel (0) target = $region9
  $region8: #{graphsage_forward.4} parent=0 // pred_region
    _
  $region9: #{graphsage_forward.4} parent=0 // pred_fallthru
    _
  // Predicated region
  $region10: #{graphsage_forward.4} parent=0 // pred_check
    _
  $region11: #{graphsage_forward.4} parent=0 // pred_check_branch
    %14 = sbr.rel (0) target = $region13
  $region12: #{graphsage_forward.4} parent=0 // pred_region
    _
  $region13: #{graphsage_forward.4} parent=0 // pred_fallthru
    _
  // Predicated region
  $region14: #{graphsage_forward.4} parent=0 // pred_check
    _
  $region15: #{graphsage_forward.4} parent=0 // pred_check_branch
    %16 = sbr.rel (0) target = $region17
  $region16: #{graphsage_forward.4} parent=0 // pred_region
    _
  $region17: #{graphsage_forward.4} parent=0 // pred_fallthru
    _
  %p18 = scmp.eq.s32.totalorder 0, 0
  // Predicated region
  $region18: #{graphsage_forward.4} parent=0 // pred_check
    %p19 = pneg %p18
  $region19: #{graphsage_forward.4} parent=0 // pred_check_branch
    %21 = sbr.rel (%p19) target = $region21
  $region20: #{graphsage_forward.4} parent=0 // pred_region
    %22 = vst [vmem:[#allocation2] sm:$0xff] 0.0
    %23 = vst [vmem:[#allocation2 + $0x8] sm:$0xff] 0.0
  $region21: #{graphsage_forward.4} parent=0 // pred_fallthru
    _
  %v24 = vld [vmem:[%s1] sm:$0xf]
  %v25 = vld [vmem:[%s1 + $0x4] sm:$0xf]
  %v26 = vld [vmem:[%s2] sm:$0xf]
  %v27 = vld [vmem:[%s2 + $0x4] sm:$0xf]
  %v28 = vld [vmem:[%s2 + $0x8] sm:$0xf]
  %v29 = vld [vmem:[%s2 + $0xc] sm:$0xf]
  %v30 = vld [vmem:[%s2 + $0x10] sm:$0xf]
  %v31 = vld [vmem:[%s2 + $0x14] sm:$0xf]
  %v32 = vld [vmem:[%s2 + $0x18] sm:$0xf]
  %v33 = vld [vmem:[%s2 + $0x1c] sm:$0xf]
  %v34 = vld [vmem:[%s2 + $0x20] sm:$0xf]
  %v35 = vld [vmem:[%s2 + $0x24] sm:$0xf]
  %v36 = vld [vmem:[%s2 + $0x28] sm:$0xf]
  %v37 = vld [vmem:[%s2 + $0x2c] sm:$0xf]
  %v38 = vld [vmem:[%s2 + $0x30] sm:$0xf]
  %v39 = vld [vmem:[%s2 + $0x34] sm:$0xf]
  %v40 = vld [vmem:[%s2 + $0x38] sm:$0xf]
  %v41 = vld [vmem:[%s2 + $0x3c] sm:$0xf]
  %v44 = vunpack.c.l.b16 %v24
  %v45 = vunpack.c.l.b16 %v25
  %v46 = vpack.c.b16 %v45, %v44
  %v64 = vunpack.c.l.b16 %v26
  %v65 = vunpack.c.l.b16 %v27
  %v66 = vunpack.c.l.b16 %v28
  %v67 = vunpack.c.l.b16 %v29
  %v68 = vunpack.c.l.b16 %v30
  %v69 = vunpack.c.l.b16 %v31
  %v70 = vunpack.c.l.b16 %v32
  %v71 = vunpack.c.l.b16 %v33
  %v72 = vunpack.c.l.b16 %v34
  %v73 = vunpack.c.l.b16 %v35
  %v74 = vunpack.c.l.b16 %v36
  %v75 = vunpack.c.l.b16 %v37
  %v76 = vunpack.c.l.b16 %v38
  %v77 = vunpack.c.l.b16 %v39
  %v78 = vunpack.c.l.b16 %v40
  %v79 = vunpack.c.l.b16 %v41
  %v80 = vpack.c.b16 %v65, %v64
  %v81 = vpack.c.b16 %v67, %v66
  %v82 = vpack.c.b16 %v69, %v68
  %v83 = vpack.c.b16 %v71, %v70
  %v84 = vpack.c.b16 %v73, %v72
  %v85 = vpack.c.b16 %v75, %v74
  %v86 = vpack.c.b16 %v77, %v76
  %v87 = vpack.c.b16 %v79, %v78
  %96 = vmatprep.subr.bf16.mxu0 0
  %97 = vmatpush1.bf16.msra.mxu0 %v80
  %98 = vmatprep.subr.bf16.mxu0 0
  %99 = vmatpush1.bf16.msra.mxu0 %v81
  %100 = vmatprep.subr.bf16.mxu0 0
  %101 = vmatpush1.bf16.msra.mxu0 %v82
  %102 = vmatprep.subr.bf16.mxu0 0
  %103 = vmatpush1.bf16.msra.mxu0 %v83
  %104 = vmatprep.subr.bf16.mxu0 0
  %105 = vmatpush1.bf16.msra.mxu0 %v84
  %106 = vmatprep.subr.bf16.mxu0 0
  %107 = vmatpush1.bf16.msra.mxu0 %v85
  %108 = vmatprep.subr.bf16.mxu0 0
  %109 = vmatpush1.bf16.msra.mxu0 %v86
  %110 = vmatprep.subr.bf16.mxu0 0
  %111 = vmatpush1.bf16.msra.mxu0 %v87
  %112 = vmatprep.subr.bf16.mxu0 0
  %113 = vmatpush1.bf16.msra.mxu0 0
  %114 = vmatprep.subr.bf16.mxu0 0
  %115 = vmatpush1.bf16.msra.mxu0 0
  %116 = vmatprep.subr.bf16.mxu0 0
  %117 = vmatpush1.bf16.msra.mxu0 0
  %118 = vmatprep.subr.bf16.mxu0 0
  %119 = vmatpush1.bf16.msra.mxu0 0
  %120 = vmatprep.subr.bf16.mxu0 0
  %121 = vmatpush1.bf16.msra.mxu0 0
  %122 = vmatprep.subr.bf16.mxu0 0
  %123 = vmatpush1.bf16.msra.mxu0 0
  %124 = vmatprep.subr.bf16.mxu0 0
  %125 = vmatpush1.bf16.msra.mxu0 0
  %126 = vmatprep.subr.bf16.mxu0 0
  %127 = vmatpush1.bf16.msra.mxu0 0
  %128 = vmatprep.mubr.bf16.mxu0 0
  %129 = vmatmul.mubr.bf16.gmra.mrb[0].mxu0 %v46
  %v130 = vpop.f32.mrb[0].mxu0
  %v131 = vadd.f32 0.0, %v130
  %v132 = vpop.f32.mrb[0].mxu0
  %v133 = vpop.f32.mrb[0].mxu0
  %v134 = vadd.f32 0.0, %v133
  %v135 = vpop.f32.mrb[0].mxu0
  %136 = vdwg.mxu0
  %v137 = vld [vmem:[#allocation2] sm:$0xff]
  %v138 = vld [vmem:[#allocation2 + $0x8] sm:$0xff]
  %v139 = vld [vmem:[%s0] sm:$0xf]
  %v140 = vld [vmem:[%s0 + $0x4] sm:$0xf]
  %v141 = vpack.c.bf16 %v134, %v131
  %v144 = vunpack.c.l.b16 %v139
  %v145 = vunpack.c.l.b16 %v140
  %v146 = vpack.c.b16 %v145, %v144
  %vm147 = vcmask 130048
  %v149 = vsel %vm147, %v146, 0
  %151 = vmatprep.subr.bf16.mxu0 0
  %152 = vmatpush1.bf16.msra.mxu0 %v141
  %153 = vmatprep.subr.bf16.mxu0 0
  %154 = vmatpush1.bf16.msra.mxu0 0
  %155 = vmatprep.subr.bf16.mxu0 0
  %156 = vmatpush1.bf16.msra.mxu0 0
  %157 = vmatprep.subr.bf16.mxu0 0
  %158 = vmatpush1.bf16.msra.mxu0 0
  %159 = vmatprep.subr.bf16.mxu0 0
  %160 = vmatpush1.bf16.msra.mxu0 0
  %161 = vmatprep.subr.bf16.mxu0 0
  %162 = vmatpush1.bf16.msra.mxu0 0
  %163 = vmatprep.subr.bf16.mxu0 0
  %164 = vmatpush1.bf16.msra.mxu0 0
  %165 = vmatprep.subr.bf16.mxu0 0
  %166 = vmatpush1.bf16.msra.mxu0 0
  %167 = vmatprep.subr.bf16.mxu0 0
  %168 = vmatpush1.bf16.msra.mxu0 0
  %169 = vmatprep.subr.bf16.mxu0 0
  %170 = vmatpush1.bf16.msra.mxu0 0
  %171 = vmatprep.subr.bf16.mxu0 0
  %172 = vmatpush1.bf16.msra.mxu0 0
  %173 = vmatprep.subr.bf16.mxu0 0
  %174 = vmatpush1.bf16.msra.mxu0 0
  %175 = vmatprep.subr.bf16.mxu0 0
  %176 = vmatpush1.bf16.msra.mxu0 0
  %177 = vmatprep.subr.bf16.mxu0 0
  %178 = vmatpush1.bf16.msra.mxu0 0
  %179 = vmatprep.subr.bf16.mxu0 0
  %180 = vmatpush1.bf16.msra.mxu0 0
  %181 = vmatprep.subr.bf16.mxu0 0
  %182 = vmatpush1.bf16.msra.mxu0 0
  %183 = vmatprep.mubr.bf16.mxu0 0
  %184 = vmatmul.mubr.bf16.gmra.mrb[0].mxu0 %v149
  %v185 = vpop.f32.mrb[0].mxu0
  %v186 = vadd.f32 0.0, %v185
  %v187 = vpop.f32.mrb[0].mxu0
  %v188 = vpop.f32.mrb[0].mxu0
  %v189 = vadd.f32 0.0, %v188
  %v190 = vpop.f32.mrb[0].mxu0
  %191 = vdwg.mxu0
  %v192 = vadd.f32 %v137, %v186
  %v193 = vadd.f32 %v138, %v189
  %194 = vst [vmem:[#allocation2] sm:$0xff] %v192
  %195 = vst [vmem:[#allocation2 + $0x8] sm:$0xff] %v193
  // Predicated region
  $region22: #{graphsage_forward.4} parent=0 // pred_check
    %p196 = pneg %p18
  $region23: #{graphsage_forward.4} parent=0 // pred_check_branch
    %198 = sbr.rel (%p196) target = $region25
  $region24: #{graphsage_forward.4} parent=0 // pred_region
    %v199 = vld [vmem:[#allocation2] sm:$0xff]
    %v200 = vld [vmem:[#allocation2 + $0x8] sm:$0xff]
    %v201 = vld [vmem:[%s3] sm:$0x1]
    %v203 = vlaneseq
    %v204 = vshrl.u32 %v203, 7
    %v205 = vsub.s32 0, %v204
    %v206 = vrot.slane %v201, %v205
    %v208 = vadd.f32 %v199, %v206
    %v209 = vadd.f32 %v200, %v206
    %v210 = vmax.f32 %v208, 0.0
    %v211 = vmax.f32 %v209, 0.0
    %v212 = vpack.c.bf16 %v211, %v210
    %v214 = vunpack.c.l.b16 %v212
    %v215 = vunpack.c.h.b16 %v212
    %v216 = vpack.c.b16 %v214, %v214
    %v217 = vpack.c.b16 %v215, %v215
    %220 = vst [vmem:[%s4] sm:$0xf] %v216
    %221 = vst [vmem:[%s4 + $0x4] sm:$0xf] %v217
  $region25: #{graphsage_forward.4} parent=0 // pred_fallthru
    _
  // Predicated region
  $region26: #{graphsage_forward.4} parent=0 // pred_check
    _
  $region27: #{graphsage_forward.4} parent=0 // pred_check_branch
    %223 = sbr.rel (0) target = $region29
  $region28: #{graphsage_forward.4} parent=0 // pred_region
    _
  $region29: #{graphsage_forward.4} parent=0 // pred_fallthru
    _
  // Predicated region
  $region30: #{graphsage_forward.4} parent=0 // pred_check
    _
  $region31: #{graphsage_forward.4} parent=0 // pred_check_branch
    %225 = sbr.rel (0) target = $region33
  $region32: #{graphsage_forward.4} parent=0 // pred_region
    _
  $region33: #{graphsage_forward.4} parent=0 // pred_fallthru
    _

</llo_original>
